<compile_context>
chip_gen: v5e
topology: v5e:2x2
jax: 0.10.0
libtpu: 0.0.40
codegen_flags: <defaults>
</compile_context>

<pallas_src>
import functools

import jax
import jax.numpy as jnp
from jax import lax
from jax.experimental import pallas as pl
from jax.experimental.pallas import tpu as pltpu


def _se_kernel(x_ref, w1_ref, b1_ref, w2_ref, b2_ref, o_ref, *, inv_hw):
    """Single-pass SE: pool over the full spatial axis, FC chain, rescale.

    x_ref/o_ref: (NB, C, HW) blocks; w1: (C, Cr), b1: (1, Cr), w2: (Cr, C),
    b2: (1, C).  Pool and FC accumulate in f32 regardless of the I/O dtype.
    """
    # Global average pool over the spatial (lane) axis.
    pooled = jnp.sum(x_ref[...].astype(jnp.float32), axis=-1) * inv_hw      # (NB, C)

    # fc1 + ReLU, fc2 + sigmoid — row-oriented, no in-kernel transposes.
    # (FC FLOPs are negligible; no padding/restructuring of the tiny matmuls.)
    h = jnp.dot(pooled, w1_ref[...], preferred_element_type=jnp.float32) + b1_ref[...]
    h = jnp.maximum(h, 0.0)                                                  # (NB, Cr)
    s = jnp.dot(h, w2_ref[...], preferred_element_type=jnp.float32) + b2_ref[...]
    s = jax.nn.sigmoid(s)                                                    # (NB, C)

    # Re-read x from VMEM for the rescale (keeps the big block's live range
    # short); multiply in f32 and round once on the store.
    o_ref[...] = (x_ref[...].astype(jnp.float32) * s[:, :, None]).astype(o_ref.dtype)


def _se_kernel_hw_tiled(x_ref, w1_ref, b1_ref, w2_ref, b2_ref, o_ref, pool_ref,
                        *, inv_hw, hw, thw):
    """Two passes over HW chunks (grid = (batch, pass p in {0,1}, chunk h)).

    Pass 0 accumulates the spatial sum of each chunk into pool_ref (f32).
    Pass 1 applies the channel scale to each chunk and writes the output.
    The tiny FC chain is recomputed every step from the current pool (kept out
    of pl.when); only its pass-1 value — computed from the complete pool — is
    ever consumed.
    """
    p = pl.program_id(1)
    h = pl.program_id(2)

    @pl.when((p == 0) & (h == 0))
    def _init():
        pool_ref[...] = jnp.zeros_like(pool_ref)

    pooled = pool_ref[...] * inv_hw                                          # (1, C)
    hfc = jnp.dot(pooled, w1_ref[...], preferred_element_type=jnp.float32) + b1_ref[...]
    hfc = jnp.maximum(hfc, 0.0)
    s = jnp.dot(hfc, w2_ref[...], preferred_element_type=jnp.float32) + b2_ref[...]
    s = jax.nn.sigmoid(s)                                                    # (1, C)

    @pl.when(p == 0)
    def _accumulate():
        xs = x_ref[...].astype(jnp.float32)
        if hw % thw != 0:
            # Ragged last chunk: zero out-of-range columns before summing
            # (padding contents of a ragged input block are undefined).
            pos = h * thw + lax.broadcasted_iota(jnp.int32, xs.shape, 2)
            xs = jnp.where(pos < hw, xs, 0.0)
        pool_ref[...] += jnp.sum(xs, axis=-1)

    @pl.when(p == 1)
    def _rescale():
        o_ref[...] = (x_ref[...].astype(jnp.float32) * s[:, :, None]).astype(o_ref.dtype)


def se_layer(x_nchw, w1, b1, w2, b2, *,
             target_block_bytes=2 << 20, max_block_bytes=4 << 20):
    """SELayer forward.

    x_nchw: (B, C, H, W); w1: (C, Cr) = torch fc1.weight.T, b1: (Cr,);
    w2: (Cr, C) = torch fc2.weight.T, b2: (C,).  Returns (B, C, H, W).
    Works for f32 or bf16 x (bf16 halves HBM traffic; accumulation stays f32).
    """
    B, C, H, W = x_nchw.shape
    Cr = w1.shape[1]
    HW = H * W
    itemsize = x_nchw.dtype.itemsize
    inv_hw = 1.0 / float(HW)

    x = x_nchw.reshape(B, C, HW)          # metadata-only reshape, no HBM pass
    b1_2d = b1.reshape(1, Cr)
    b2_2d = b2.reshape(1, C)

    weight_bytes = (w1.size * w1.dtype.itemsize + w2.size * w2.dtype.itemsize
                    + b1.size * b1.dtype.itemsize + b2.size * b2.dtype.itemsize)
    per_elem_bytes = C * HW * itemsize    # one batch element, one copy

    # Weights/biases: whole array every grid step (block dims == array dims).
    weight_specs = [
        pl.BlockSpec((C, Cr), lambda *_: (0, 0)),
        pl.BlockSpec((1, Cr), lambda *_: (0, 0)),
        pl.BlockSpec((Cr, C), lambda *_: (0, 0)),
        pl.BlockSpec((1, C), lambda *_: (0, 0)),
    ]

    if per_elem_bytes <= max_block_bytes:
        # ---- Primary path: whole (C, HW) feature maps per block, single pass.
        nb = int(max(1, min(target_block_bytes // per_elem_bytes, B)))
        # Feed both v7x TensorCores (>=2 balanced grid steps) only when each
        # half-batch block is still roofline-sized; on single-TC v5e/v6e small
        # problems keep one big step.
        half = (B + 1) // 2
        if B >= 2 and nb > half and half * per_elem_bytes >= (1 << 20):
            nb = half
        grid_b = pl.cdiv(B, nb)           # ragged last batch block is fine

        block_bytes = nb * per_elem_bytes
        vmem_bytes = int(4 * block_bytes + 2 * weight_bytes + (8 << 20))

        kernel = functools.partial(_se_kernel, inv_hw=inv_hw)
        out = pl.pallas_call(
            kernel,
            out_shape=jax.ShapeDtypeStruct((B, C, HW), x.dtype),
            grid_spec=pltpu.PrefetchScalarGridSpec(
                num_scalar_prefetch=0,
                grid=(grid_b,),
                in_specs=[pl.BlockSpec((nb, C, HW), lambda i: (i, 0, 0))] + weight_specs,
                out_specs=pl.BlockSpec((nb, C, HW), lambda i: (i, 0, 0)),
            ),
            compiler_params=pltpu.CompilerParams(
                dimension_semantics=("parallel",),
                vmem_limit_bytes=vmem_bytes),
        )(x, w1, b1_2d, w2, b2_2d)
        return out.reshape(B, C, H, W)

    # ---- Fallback path: one batch element does not fit the VMEM budget.
    # Tile HW into lane-aligned chunks; two passes (pool, then rescale).
    # TODO(synk): extremely large C (C*128*itemsize >> target) would also need
    # channel tiling of the pool; not required for typical SE channel counts.
    thw = max(128, (target_block_bytes // (C * itemsize)) // 128 * 128)
    if thw >= HW:
        thw = HW                           # full dim -> exempt from 128 rule
    n_hw = pl.cdiv(HW, thw)

    block_bytes = C * thw * itemsize
    vmem_bytes = int(4 * block_bytes + 2 * weight_bytes + (8 << 20))

    kernel = functools.partial(_se_kernel_hw_tiled, inv_hw=inv_hw, hw=HW, thw=thw)
    out = pl.pallas_call(
        kernel,
        out_shape=jax.ShapeDtypeStruct((B, C, HW), x.dtype),
        grid_spec=pltpu.PrefetchScalarGridSpec(
            num_scalar_prefetch=0,
            grid=(B, 2, n_hw),
            in_specs=[pl.BlockSpec((1, C, thw), lambda b, p, h: (b, 0, h))] + weight_specs,
            # All pass-0 steps alias output chunk 0 (h*p == 0), so the output
            # buffer is only written back after pass 1 has filled it: output
            # HBM traffic is exactly one pass, with no garbage writebacks.
            out_specs=pl.BlockSpec((1, C, thw), lambda b, p, h: (b, 0, h * p)),
            scratch_shapes=[pltpu.VMEM((1, C), jnp.float32)],
        ),
        compiler_params=pltpu.CompilerParams(
            dimension_semantics=("parallel", "arbitrary", "arbitrary"),
            vmem_limit_bytes=vmem_bytes),
    )(x, w1, b1_2d, w2, b2_2d)
    return out.reshape(B, C, H, W)


def se_layer_reference(x_nchw, w1, b1, w2, b2):
    # Pure-JAX reference for validation.
    y = jnp.mean(x_nchw, axis=(2, 3))                 # (B, C)
    y = jnp.maximum(y @ w1 + b1, 0.0)                 # (B, Cr)
    y = jax.nn.sigmoid(y @ w2 + b2)                   # (B, C)
    return x_nchw * y[:, :, None, None]


if __name__ == "__main__":
    # Small shapes consistent with the module (channel >= reduction).
    B, C, H, W = 2, 64, 16, 16
    reduction = 16
    Cr = C // reduction

    key = jax.random.PRNGKey(0)
    kx, k1, kb1, k2, kb2 = jax.random.split(key, 5)

    x = jax.random.normal(kx, (B, C, H, W), dtype=jnp.float32)
    # y = x @ W + b convention (W = torch Linear weight transposed).
    w1 = jax.random.normal(k1, (C, Cr), dtype=jnp.float32) * (1.0 / jnp.sqrt(C))
    b1 = jax.random.normal(kb1, (Cr,), dtype=jnp.float32) * 0.1
    w2 = jax.random.normal(k2, (Cr, C), dtype=jnp.float32) * (1.0 / jnp.sqrt(Cr))
    b2 = jax.random.normal(kb2, (C,), dtype=jnp.float32) * 0.1

    ref = se_layer_reference(x, w1, b1, w2, b2)

    # 1) Primary single-pass path (whole feature maps per block).
    out = jax.block_until_ready(se_layer(x, w1, b1, w2, b2))
    assert out.shape == (B, C, H, W)
    assert jnp.allclose(out, ref, atol=1e-5, rtol=1e-5), "primary path mismatch"

    # 2) HW-tiled two-pass fallback path (forced via a tiny block budget).
    out_tiled = jax.block_until_ready(
        se_layer(x, w1, b1, w2, b2,
                 target_block_bytes=32 << 10, max_block_bytes=32 << 10))
    assert jnp.allclose(out_tiled, ref, atol=1e-5, rtol=1e-5), "tiled path mismatch"

    # 3) bf16 I/O path (f32 pool/FC accumulation inside the kernel).
    x_bf16 = x.astype(jnp.bfloat16)
    ref_bf16 = se_layer_reference(x_bf16.astype(jnp.float32), w1, b1, w2, b2)
    out_bf16 = jax.block_until_ready(se_layer(x_bf16, w1, b1, w2, b2))
    assert out_bf16.dtype == jnp.bfloat16
    assert jnp.allclose(out_bf16.astype(jnp.float32), ref_bf16,
                        atol=2e-2, rtol=2e-2), "bf16 path mismatch"

    print("KERNEL_OK")
</pallas_src>

<mosaic_0001>
module attributes {stable_mosaic.version = 11 : i64} {
  func.func @_se_kernel(%arg0: i32, %arg1: memref<2x64x256xf32, #tpu.memory_space<vmem>>, %arg2: memref<64x4xf32, #tpu.memory_space<vmem>>, %arg3: memref<1x4xf32, #tpu.memory_space<vmem>>, %arg4: memref<4x64xf32, #tpu.memory_space<vmem>>, %arg5: memref<1x64xf32, #tpu.memory_space<vmem>>, %arg6: memref<2x64x256xf32, #tpu.memory_space<vmem>>) attributes {dimension_semantics = [#tpu.dimension_semantics<parallel>], iteration_bounds = array<i64: 1>, scalar_prefetch = 0 : i64, scratch_operands = 0 : i64, tpu.core_type = #tpu.core_type<tc>, window_params = [{transform_indices = @transform_0, window_bounds = array<i64: 2, 64, 256>}, {pipeline_mode = #tpu.pipeline_mode<synchronous>, transform_indices = @transform_1, window_bounds = array<i64: 64, 4>}, {pipeline_mode = #tpu.pipeline_mode<synchronous>, transform_indices = @transform_2, window_bounds = array<i64: 1, 4>}, {pipeline_mode = #tpu.pipeline_mode<synchronous>, transform_indices = @transform_3, window_bounds = array<i64: 4, 64>}, {pipeline_mode = #tpu.pipeline_mode<synchronous>, transform_indices = @transform_4, window_bounds = array<i64: 1, 64>}, {transform_indices = @transform_5, window_bounds = array<i64: 2, 64, 256>}]} {
    %c0 = arith.constant 0 : index
    %c0_0 = arith.constant 0 : index
    %c0_1 = arith.constant 0 : index
    %0 = vector.load %arg1[%c0, %c0_0, %c0_1] : memref<2x64x256xf32, #tpu.memory_space<vmem>>, vector<2x64x256xf32>
    %cst = arith.constant dense<0.000000e+00> : vector<2x64xf32>
    %1 = vector.multi_reduction <add>, %0, %cst [2] : vector<2x64x256xf32> to vector<2x64xf32>
    %cst_2 = arith.constant 3.906250e-03 : f32
    %2 = vector.broadcast %cst_2 : f32 to vector<2x64xf32>
    %3 = arith.mulf %1, %2 : vector<2x64xf32>
    %c0_3 = arith.constant 0 : index
    %c0_4 = arith.constant 0 : index
    %4 = vector.load %arg2[%c0_3, %c0_4] : memref<64x4xf32, #tpu.memory_space<vmem>>, vector<64x4xf32>
    %cst_5 = arith.constant dense<0.000000e+00> : vector<2x4xf32>
    %5 = tpu.matmul %3, %4, %cst_5 {dimension_numbers = #tpu.dot_dimension_numbers<[1], [0], [0], [1], [0, 0, 1, 1], [], []>} : vector<2x64xf32>, vector<64x4xf32>, vector<2x4xf32> -> vector<2x4xf32>
    %c0_6 = arith.constant 0 : index
    %c0_7 = arith.constant 0 : index
    %6 = vector.load %arg3[%c0_6, %c0_7] : memref<1x4xf32, #tpu.memory_space<vmem>>, vector<1x4xf32>
    %7 = vector.broadcast %6 : vector<1x4xf32> to vector<2x4xf32>
    %8 = arith.addf %5, %7 : vector<2x4xf32>
    %cst_8 = arith.constant 0.000000e+00 : f32
    %9 = vector.broadcast %cst_8 : f32 to vector<2x4xf32>
    %10 = arith.maximumf %8, %9 : vector<2x4xf32>
    %c0_9 = arith.constant 0 : index
    %c0_10 = arith.constant 0 : index
    %11 = vector.load %arg4[%c0_9, %c0_10] : memref<4x64xf32, #tpu.memory_space<vmem>>, vector<4x64xf32>
    %cst_11 = arith.constant dense<0.000000e+00> : vector<2x64xf32>
    %12 = tpu.matmul %10, %11, %cst_11 {dimension_numbers = #tpu.dot_dimension_numbers<[1], [0], [0], [1], [0, 0, 1, 1], [], []>} : vector<2x4xf32>, vector<4x64xf32>, vector<2x64xf32> -> vector<2x64xf32>
    %c0_12 = arith.constant 0 : index
    %c0_13 = arith.constant 0 : index
    %13 = vector.load %arg5[%c0_12, %c0_13] : memref<1x64xf32, #tpu.memory_space<vmem>>, vector<1x64xf32>
    %14 = vector.broadcast %13 : vector<1x64xf32> to vector<2x64xf32>
    %15 = arith.addf %12, %14 : vector<2x64xf32>
    %16 = arith.negf %15 : vector<2x64xf32>
    %17 = math.exp %16 : vector<2x64xf32>
    %cst_14 = arith.constant 1.000000e+00 : f32
    %18 = vector.broadcast %cst_14 : f32 to vector<2x64xf32>
    %19 = arith.addf %18, %17 : vector<2x64xf32>
    %20 = arith.divf %18, %19 : vector<2x64xf32>
    %c0_15 = arith.constant 0 : index
    %c0_16 = arith.constant 0 : index
    %c0_17 = arith.constant 0 : index
    %21 = vector.load %arg1[%c0_15, %c0_16, %c0_17] : memref<2x64x256xf32, #tpu.memory_space<vmem>>, vector<2x64x256xf32>
    %22 = vector.shape_cast %20 : vector<2x64xf32> to vector<2x64x1xf32>
    %23 = vector.broadcast %22 : vector<2x64x1xf32> to vector<2x64x256xf32>
    %24 = arith.mulf %21, %23 : vector<2x64x256xf32>
    %c0_18 = arith.constant 0 : index
    %c0_19 = arith.constant 0 : index
    %c0_20 = arith.constant 0 : index
    %25 = vector.load %arg6[%c0_18, %c0_19, %c0_20] : memref<2x64x256xf32, #tpu.memory_space<vmem>>, vector<2x64x256xf32>
    tpu.vector_store %arg6[%c0_18, %c0_19, %c0_20], %24 {strides = array<i32>} : memref<2x64x256xf32, #tpu.memory_space<vmem>>, vector<2x64x256xf32>,
    return
  }
  func.func @transform_0(%arg0: i32) -> (i32, i32, i32) {
    %c0_i32 = arith.constant 0 : i32
    %c0_i32_0 = arith.constant 0 : i32
    %c0_i32_1 = arith.constant 0 : i32
    return %arg0, %c0_i32, %c0_i32_0 : i32, i32, i32
  }
  func.func @transform_1(%arg0: i32) -> (i32, i32) {
    %c0_i32 = arith.constant 0 : i32
    %c0_i32_0 = arith.constant 0 : i32
    %c0_i32_1 = arith.constant 0 : i32
    return %c0_i32, %c0_i32_0 : i32, i32
  }
  func.func @transform_2(%arg0: i32) -> (i32, i32) {
    %c0_i32 = arith.constant 0 : i32
    %c0_i32_0 = arith.constant 0 : i32
    %c0_i32_1 = arith.constant 0 : i32
    return %c0_i32, %c0_i32_0 : i32, i32
  }
  func.func @transform_3(%arg0: i32) -> (i32, i32) {
    %c0_i32 = arith.constant 0 : i32
    %c0_i32_0 = arith.constant 0 : i32
    %c0_i32_1 = arith.constant 0 : i32
    return %c0_i32, %c0_i32_0 : i32, i32
  }
  func.func @transform_4(%arg0: i32) -> (i32, i32) {
    %c0_i32 = arith.constant 0 : i32
    %c0_i32_0 = arith.constant 0 : i32
    %c0_i32_1 = arith.constant 0 : i32
    return %c0_i32, %c0_i32_0 : i32, i32
  }
  func.func @transform_5(%arg0: i32) -> (i32, i32, i32) {
    %c0_i32 = arith.constant 0 : i32
    %c0_i32_0 = arith.constant 0 : i32
    %c0_i32_1 = arith.constant 0 : i32
    return %arg0, %c0_i32, %c0_i32_0 : i32, i32, i32
  }
}

</mosaic_0001>

<llo_original>
// kernel: tpu_custom_call.1
$region0: #{tpu_custom_call.1}
  #allocation0 [shape = 'u32[]', space=smem, size = 0x4, offset = 0x4, fixed_abs, tag = 'smem constant byte address 0x4 - core index']
  #allocation1 [shape = 'u32[72,128]{1,0:T(1,128)}', space=vmem, size = 0x9000, scoped, tag = 'internal scratch']
  %s0 = inlined_call_operand.hbm [shape: f32[2,64,256], index: 0, kind: input, shape index: {}]
  %s1 = inlined_call_operand.vmem [shape: f32[64,4], index: 1, kind: input, shape index: {}]
  %s2 = inlined_call_operand.vmem [shape: f32[1,4], index: 2, kind: input, shape index: {}]
  %s3 = inlined_call_operand.vmem [shape: f32[4,64], index: 3, kind: input, shape index: {}]
  %s4 = inlined_call_operand.vmem [shape: f32[1,64], index: 4, kind: input, shape index: {}]
  %s5 = inlined_call_operand.hbm [shape: f32[2,64,256], index: 5, kind: output, shape index: {}]
  %s6 = sld [smem:[#allocation0]]
  $region34: #{tpu_custom_call.1} parent=0
    _
  %s8 = ssub.s32 1, %s6
  %s9 = scalar_select 0, %s8, %s6
  $region1: #{tpu_custom_call.1} parent=0
    #allocation2 [shape = 'u8[131072]{0}', space=vmem, size = 0x20000, scoped, tag = 'input window, operand 0, single buffered']
    #allocation3 [shape = 's32[1]{0}', space=sflag, size = 0x4, scoped, tag = 'scoped memory for tpu_custom_call.1']
    #allocation4 [shape = 's32[1]{0}', space=sflag, size = 0x4, scoped, tag = 'scoped memory for tpu_custom_call.1']
    #allocation5 [shape = 'u8[131072]{0}', space=vmem, size = 0x20000, scoped, tag = 'output window, operand 0, single buffered']
    %10 = vsyncpa [#allocation3], 0
    %11 = vsyncpa [#allocation4], 0
    // Predicated region
    $region2: #{tpu_custom_call.1} parent=1 // pred_check
      _
    $region3: #{tpu_custom_call.1} parent=1 // pred_check_branch
      %13 = sbr.rel (0) target = $region5
    $region4: #{tpu_custom_call.1} parent=1 // pred_region
      %15 = vsyncadd [#allocation3], 0
      %s16 = sshll.u32 %s0, 4
      %s17 = int_to_ptr.hbm [resolvable:$true] %s16
      %s18 = sshll.u32 [#allocation2], 4
      %s19 = int_to_ptr.vmem [resolvable:$true] %s18
      %24 = dma.hbm_to_vmem [thread:$0]  %s17, 4096, %s19, [#allocation3], 256, 256, 16
    $region5: #{tpu_custom_call.1} parent=1 // pred_fallthru
      _
    // Predicated region
    $region6: #{tpu_custom_call.1} parent=1 // pred_check
      _
    $region7: #{tpu_custom_call.1} parent=1 // pred_check_branch
      %26 = sbr.rel (0) target = $region9
    $region8: #{tpu_custom_call.1} parent=1 // pred_region
      _
    $region9: #{tpu_custom_call.1} parent=1 // pred_fallthru
      _
    // Predicated region
    $region10: #{tpu_custom_call.1} parent=1 // pred_check
      _
    $region11: #{tpu_custom_call.1} parent=1 // pred_check_branch
      %28 = sbr.rel (0) target = $region13
    $region12: #{tpu_custom_call.1} parent=1 // pred_region
      _
    $region13: #{tpu_custom_call.1} parent=1 // pred_fallthru
      _
    // Predicated region
    $region14: #{tpu_custom_call.1} parent=1 // pred_check
      _
    $region15: #{tpu_custom_call.1} parent=1 // pred_check_branch
      %30 = sbr.rel (0) target = $region17
    $region16: #{tpu_custom_call.1} parent=1 // pred_region
      _
    $region17: #{tpu_custom_call.1} parent=1 // pred_fallthru
      _
    // Predicated region
    $region18: #{tpu_custom_call.1} parent=1 // pred_check
      _
    $region19: #{tpu_custom_call.1} parent=1 // pred_check_branch
      %32 = sbr.rel (0) target = $region21
    $region20: #{tpu_custom_call.1} parent=1 // pred_region
      _
    $region21: #{tpu_custom_call.1} parent=1 // pred_fallthru
      _
    // Predicated region
    $region22: #{tpu_custom_call.1} parent=1 // pred_check
      _
    $region23: #{tpu_custom_call.1} parent=1 // pred_check_branch
      %34 = sbr.rel (0) target = $region25
    $region24: #{tpu_custom_call.1} parent=1 // pred_region
      %36 = dma.done [#allocation3], 4096
    $region25: #{tpu_custom_call.1} parent=1 // pred_fallthru
      _
    %v37 = vld [vmem:[#allocation2] sm:$0xff]
    %v38 = vld [vmem:[#allocation2 + $0x8] sm:$0xff]
    %v39 = vld [vmem:[#allocation2 + $0x10] sm:$0xff]
    %v40 = vld [vmem:[#allocation2 + $0x18] sm:$0xff]
    %v41 = vld [vmem:[#allocation2 + $0x20] sm:$0xff]
    %v42 = vld [vmem:[#allocation2 + $0x28] sm:$0xff]
    %v43 = vld [vmem:[#allocation2 + $0x30] sm:$0xff]
    %v44 = vld [vmem:[#allocation2 + $0x38] sm:$0xff]
    %v45 = vld [vmem:[#allocation2 + $0x40] sm:$0xff]
    %v46 = vld [vmem:[#allocation2 + $0x48] sm:$0xff]
    %v47 = vld [vmem:[#allocation2 + $0x50] sm:$0xff]
    %v48 = vld [vmem:[#allocation2 + $0x58] sm:$0xff]
    %v49 = vld [vmem:[#allocation2 + $0x60] sm:$0xff]
    %v50 = vld [vmem:[#allocation2 + $0x68] sm:$0xff]
    %v51 = vld [vmem:[#allocation2 + $0x70] sm:$0xff]
    %v52 = vld [vmem:[#allocation2 + $0x78] sm:$0xff]
    %v53 = vld [vmem:[#allocation2 + $0x80] sm:$0xff]
    %v54 = vld [vmem:[#allocation2 + $0x88] sm:$0xff]
    %v55 = vld [vmem:[#allocation2 + $0x90] sm:$0xff]
    %v56 = vld [vmem:[#allocation2 + $0x98] sm:$0xff]
    %v57 = vld [vmem:[#allocation2 + $0xa0] sm:$0xff]
    %v58 = vld [vmem:[#allocation2 + $0xa8] sm:$0xff]
    %v59 = vld [vmem:[#allocation2 + $0xb0] sm:$0xff]
    %v60 = vld [vmem:[#allocation2 + $0xb8] sm:$0xff]
    %v61 = vld [vmem:[#allocation2 + $0xc0] sm:$0xff]
    %v62 = vld [vmem:[#allocation2 + $0xc8] sm:$0xff]
    %v63 = vld [vmem:[#allocation2 + $0xd0] sm:$0xff]
    %v64 = vld [vmem:[#allocation2 + $0xd8] sm:$0xff]
    %v65 = vld [vmem:[#allocation2 + $0xe0] sm:$0xff]
    %v66 = vld [vmem:[#allocation2 + $0xe8] sm:$0xff]
    %v67 = vld [vmem:[#allocation2 + $0xf0] sm:$0xff]
    %v68 = vld [vmem:[#allocation2 + $0xf8] sm:$0xff]
    %v69 = vadd.f32 %v37, %v38
    %70 = vadd.xlane.f32.xlu0 %v69
    %v71 = vpop.xlane.xlu0 %70
    %v72 = vadd.f32 %v39, %v40
    %73 = vadd.xlane.f32.xlu0 %v72
    %v74 = vpop.xlane.xlu0 %73
    %v75 = vadd.f32 %v41, %v42
    %76 = vadd.xlane.f32.xlu0 %v75
    %v77 = vpop.xlane.xlu0 %76
    %v78 = vadd.f32 %v43, %v44
    %79 = vadd.xlane.f32.xlu0 %v78
    %v80 = vpop.xlane.xlu0 %79
    %v81 = vadd.f32 %v45, %v46
    %82 = vadd.xlane.f32.xlu0 %v81
    %v83 = vpop.xlane.xlu0 %82
    %v84 = vadd.f32 %v47, %v48
    %85 = vadd.xlane.f32.xlu0 %v84
    %v86 = vpop.xlane.xlu0 %85
    %v87 = vadd.f32 %v49, %v50
    %88 = vadd.xlane.f32.xlu0 %v87
    %v89 = vpop.xlane.xlu0 %88
    %v90 = vadd.f32 %v51, %v52
    %91 = vadd.xlane.f32.xlu0 %v90
    %v92 = vpop.xlane.xlu0 %91
    %v93 = vadd.f32 %v53, %v54
    %94 = vadd.xlane.f32.xlu0 %v93
    %v95 = vpop.xlane.xlu0 %94
    %v96 = vadd.f32 %v55, %v56
    %97 = vadd.xlane.f32.xlu0 %v96
    %v98 = vpop.xlane.xlu0 %97
    %v99 = vadd.f32 %v57, %v58
    %100 = vadd.xlane.f32.xlu0 %v99
    %v101 = vpop.xlane.xlu0 %100
    %v102 = vadd.f32 %v59, %v60
    %103 = vadd.xlane.f32.xlu0 %v102
    %v104 = vpop.xlane.xlu0 %103
    %v105 = vadd.f32 %v61, %v62
    %106 = vadd.xlane.f32.xlu0 %v105
    %v107 = vpop.xlane.xlu0 %106
    %v108 = vadd.f32 %v63, %v64
    %109 = vadd.xlane.f32.xlu0 %v108
    %v110 = vpop.xlane.xlu0 %109
    %v111 = vadd.f32 %v65, %v66
    %112 = vadd.xlane.f32.xlu0 %v111
    %v113 = vpop.xlane.xlu0 %112
    %v114 = vadd.f32 %v67, %v68
    %115 = vadd.xlane.f32.xlu0 %v114
    %v116 = vpop.xlane.xlu0 %115
    %v117 = vmul.f32 %v71, 0.00390625
    %v118 = vmul.f32 %v74, 0.00390625
    %v119 = vmul.f32 %v77, 0.00390625
    %v120 = vmul.f32 %v80, 0.00390625
    %v121 = vmul.f32 %v83, 0.00390625
    %v122 = vmul.f32 %v86, 0.00390625
    %v123 = vmul.f32 %v89, 0.00390625
    %v124 = vmul.f32 %v92, 0.00390625
    %v125 = vmul.f32 %v95, 0.00390625
    %v126 = vmul.f32 %v98, 0.00390625
    %v127 = vmul.f32 %v101, 0.00390625
    %v128 = vmul.f32 %v104, 0.00390625
    %v129 = vmul.f32 %v107, 0.00390625
    %v130 = vmul.f32 %v110, 0.00390625
    %v131 = vmul.f32 %v113, 0.00390625
    %v132 = vmul.f32 %v116, 0.00390625
    %v133 = vld [vmem:[%s1] sm:$0xff]
    %v134 = vld [vmem:[%s1 + $0x8] sm:$0xff]
    %v135 = vld [vmem:[%s1 + $0x10] sm:$0xff]
    %v136 = vld [vmem:[%s1 + $0x18] sm:$0xff]
    %v137 = vld [vmem:[%s1 + $0x20] sm:$0xff]
    %v138 = vld [vmem:[%s1 + $0x28] sm:$0xff]
    %v139 = vld [vmem:[%s1 + $0x30] sm:$0xff]
    %v140 = vld [vmem:[%s1 + $0x38] sm:$0xff]
    %v141 = vld [vmem:[%s2] sm:$0x1]
    %v143 = vperm.slane %v141, 0
    %v161 = vlaneseq
    %v162 = vand.u32 %v161, 127
    %v163 = vperm.slane %v117, %v162
    %v164 = vadd.s32 %v162, 4294967288
    %v165 = vperm.slane %v118, %v164
    %vm166 = vcmask 130112
    %v167 = vsel %vm166, %v165, %v163
    %v168 = vadd.s32 %v162, 4294967280
    %v169 = vperm.slane %v119, %v168
    %vm170 = vcmask 195712
    %v171 = vsel %vm170, %v169, %v167
    %v172 = vadd.s32 %v162, 4294967272
    %v173 = vperm.slane %v120, %v172
    %vm174 = vcmask 261312
    %v175 = vsel %vm174, %v173, %v171
    %v176 = vadd.s32 %v162, 4294967264
    %v177 = vperm.slane %v121, %v176
    %vm178 = vcmask 326912
    %v179 = vsel %vm178, %v177, %v175
    %v180 = vadd.s32 %v162, 4294967256
    %v181 = vperm.slane %v122, %v180
    %vm182 = vcmask 392512
    %v183 = vsel %vm182, %v181, %v179
    %v184 = vadd.s32 %v162, 4294967248
    %v185 = vperm.slane %v123, %v184
    %vm186 = vcmask 458112
    %v187 = vsel %vm186, %v185, %v183
    %v188 = vadd.s32 %v162, 4294967240
    %v189 = vperm.slane %v124, %v188
    %vm190 = vcmask 523712
    %v191 = vsel %vm190, %v189, %v187
    %v192 = vperm.slane %v125, %v162
    %v193 = vperm.slane %v126, %v164
    %v194 = vsel %vm166, %v193, %v192
    %v195 = vperm.slane %v127, %v168
    %v196 = vsel %vm170, %v195, %v194
    %v197 = vperm.slane %v128, %v172
    %v198 = vsel %vm174, %v197, %v196
    %v199 = vperm.slane %v129, %v176
    %v200 = vsel %vm178, %v199, %v198
    %v201 = vperm.slane %v130, %v180
    %v202 = vsel %vm182, %v201, %v200
    %v203 = vperm.slane %v131, %v184
    %v204 = vsel %vm186, %v203, %v202
    %v205 = vperm.slane %v132, %v188
    %v206 = vsel %vm190, %v205, %v204
    %vm207 = vcmask 1041409
    %v208 = vsel %vm207, %v206, %v191
    %vm209 = vcmask 523264
    %v210 = vsel %vm209, %v208, 0
    %212 = vmatpush.msra.mxu0 0.0
    %213 = vmatpush.msra.mxu0 0.0
    %214 = vmatpush.msra.mxu0 0.0
    %215 = vmatpush.msra.mxu0 0.0
    %216 = vmatpush.msra.mxu0 0.0
    %217 = vmatpush.msra.mxu0 0.0
    %218 = vmatpush.msra.mxu0 0.0
    %219 = vmatpush.msra.mxu0 0.0
    %220 = vmatpush.msra.mxu0 %v140
    %221 = vmatpush.msra.mxu0 %v139
    %222 = vmatpush.msra.mxu0 %v138
    %223 = vmatpush.msra.mxu0 %v137
    %224 = vmatpush.msra.mxu0 %v136
    %225 = vmatpush.msra.mxu0 %v135
    %226 = vmatpush.msra.mxu0 %v134
    %227 = vmatpush.msra.mxu0 %v133
    %228 = vmatmul.f32.gmra.mxu0 %v210
    %v229 = vpop.f32.mrf.mxu0
    %v230 = vadd.f32 %v143, %v229
    %231 = vdwg.mxu0
    %v232 = vmax.f32 %v230, 0.0
    %v233 = vld [vmem:[%s3] sm:$0xf]
    %v234 = vld [vmem:[%s4] sm:$0x1]
    %v236 = vperm.slane %v234, 0
    %vm238 = vcmask 31744
    %v240 = vsel %vm238, %v232, 0
    %vm242 = vcmask 1043456
    %v244 = vsel %vm242, %v233, 0
    %246 = vmatpush.msra.mxu0 0.0
    %247 = vmatpush.msra.mxu0 0.0
    %248 = vmatpush.msra.mxu0 0.0
    %249 = vmatpush.msra.mxu0 0.0
    %250 = vmatpush.msra.mxu0 0.0
    %251 = vmatpush.msra.mxu0 0.0
    %252 = vmatpush.msra.mxu0 0.0
    %253 = vmatpush.msra.mxu0 0.0
    %254 = vmatpush.msra.mxu0 0.0
    %255 = vmatpush.msra.mxu0 0.0
    %256 = vmatpush.msra.mxu0 0.0
    %257 = vmatpush.msra.mxu0 0.0
    %258 = vmatpush.msra.mxu0 0.0
    %259 = vmatpush.msra.mxu0 0.0
    %260 = vmatpush.msra.mxu0 0.0
    %261 = vmatpush.msra.mxu0 %v244
    %262 = vmatmul.f32.gmra.mxu0 %v240
    %v263 = vpop.f32.mrf.mxu0
    %v264 = vadd.f32 %v236, %v263
    %265 = vdwg.mxu0
    %v266 = vxor.u32 %v264, 2147483648
    %v267 = vmul.f32 %v266, 1.442695
    %v268 = vpow.pop %v267
    %v269 = vadd.f32 %v268, 1.0
    %v270 = vrcp.pop %v269
    %v271 = vmul.f32 %v269, %v270
    %v272 = vsub.f32 1.0, %v271
    %v273 = vmul.f32 %v270, %v272
    %v274 = vadd.f32 %v270, %v273
    %vm275 = vweird.f32 %v269
    %vm276 = vweird.f32 %v270
    %vm277 = vmor %vm275, %vm276
    %v278 = vsel %vm277, %v270, %v274
    %v279 = vand.u32 2147483647, %v269
    %vm280 = vcmp.eq.f32.partialorder %v279, 8.507059e+37
    %v281 = vand.u32 %v269, 2147483648
    %v282 = vor.u32 1.1754944e-38, %v281
    %v283 = vsel %vm280, %v282, %v278
    %v284 = vmul.f32 1.0, %v283
    %v285 = vperm.slane %v284, 0
    %v286 = vlaneseq
    %v287 = vshrl.u32 %v286, 7
    %289 = vset.pattern.permute.xlu0 %v287
    %290 = vperm.xlu0 %289, %v285
    %v291 = vpop.permute.xlu0 %290
    %v292 = vlaneseq
    %v293 = vshrl.u32 %v292, 7
    %v294 = vadd.s32 %v293, 8
    %295 = vset.pattern.permute.xlu0 %v294
    %296 = vperm.xlu0 %295, %v285
    %v297 = vpop.permute.xlu0 %296
    %v298 = vlaneseq
    %v299 = vshrl.u32 %v298, 7
    %v300 = vadd.s32 %v299, 16
    %301 = vset.pattern.permute.xlu0 %v300
    %302 = vperm.xlu0 %301, %v285
    %v303 = vpop.permute.xlu0 %302
    %v304 = vlaneseq
    %v305 = vshrl.u32 %v304, 7
    %v306 = vadd.s32 %v305, 24
    %307 = vset.pattern.permute.xlu0 %v306
    %308 = vperm.xlu0 %307, %v285
    %v309 = vpop.permute.xlu0 %308
    %v310 = vlaneseq
    %v311 = vshrl.u32 %v310, 7
    %v312 = vadd.s32 %v311, 32
    %313 = vset.pattern.permute.xlu0 %v312
    %314 = vperm.xlu0 %313, %v285
    %v315 = vpop.permute.xlu0 %314
    %v316 = vlaneseq
    %v317 = vshrl.u32 %v316, 7
    %v318 = vadd.s32 %v317, 40
    %319 = vset.pattern.permute.xlu0 %v318
    %320 = vperm.xlu0 %319, %v285
    %v321 = vpop.permute.xlu0 %320
    %v322 = vlaneseq
    %v323 = vshrl.u32 %v322, 7
    %v324 = vadd.s32 %v323, 48
    %325 = vset.pattern.permute.xlu0 %v324
    %326 = vperm.xlu0 %325, %v285
    %v327 = vpop.permute.xlu0 %326
    %v328 = vlaneseq
    %v329 = vshrl.u32 %v328, 7
    %v330 = vadd.s32 %v329, 56
    %331 = vset.pattern.permute.xlu0 %v330
    %332 = vperm.xlu0 %331, %v285
    %v333 = vpop.permute.xlu0 %332
    %v334 = vperm.slane %v284, 1
    %v335 = vlaneseq
    %v336 = vshrl.u32 %v335, 7
    %338 = vset.pattern.permute.xlu0 %v336
    %339 = vperm.xlu0 %338, %v334
    %v340 = vpop.permute.xlu0 %339
    %v341 = vlaneseq
    %v342 = vshrl.u32 %v341, 7
    %v343 = vadd.s32 %v342, 8
    %344 = vset.pattern.permute.xlu0 %v343
    %345 = vperm.xlu0 %344, %v334
    %v346 = vpop.permute.xlu0 %345
    %v347 = vlaneseq
    %v348 = vshrl.u32 %v347, 7
    %v349 = vadd.s32 %v348, 16
    %350 = vset.pattern.permute.xlu0 %v349
    %351 = vperm.xlu0 %350, %v334
    %v352 = vpop.permute.xlu0 %351
    %v353 = vlaneseq
    %v354 = vshrl.u32 %v353, 7
    %v355 = vadd.s32 %v354, 24
    %356 = vset.pattern.permute.xlu0 %v355
    %357 = vperm.xlu0 %356, %v334
    %v358 = vpop.permute.xlu0 %357
    %v359 = vlaneseq
    %v360 = vshrl.u32 %v359, 7
    %v361 = vadd.s32 %v360, 32
    %362 = vset.pattern.permute.xlu0 %v361
    %363 = vperm.xlu0 %362, %v334
    %v364 = vpop.permute.xlu0 %363
    %v365 = vlaneseq
    %v366 = vshrl.u32 %v365, 7
    %v367 = vadd.s32 %v366, 40
    %368 = vset.pattern.permute.xlu0 %v367
    %369 = vperm.xlu0 %368, %v334
    %v370 = vpop.permute.xlu0 %369
    %v371 = vlaneseq
    %v372 = vshrl.u32 %v371, 7
    %v373 = vadd.s32 %v372, 48
    %374 = vset.pattern.permute.xlu0 %v373
    %375 = vperm.xlu0 %374, %v334
    %v376 = vpop.permute.xlu0 %375
    %v377 = vlaneseq
    %v378 = vshrl.u32 %v377, 7
    %v379 = vadd.s32 %v378, 56
    %380 = vset.pattern.permute.xlu0 %v379
    %381 = vperm.xlu0 %380, %v334
    %v382 = vpop.permute.xlu0 %381
    %v383 = vmul.f32 %v37, %v291
    %v384 = vmul.f32 %v38, %v291
    %v385 = vmul.f32 %v39, %v297
    %v386 = vmul.f32 %v40, %v297
    %v387 = vmul.f32 %v41, %v303
    %v388 = vmul.f32 %v42, %v303
    %v389 = vmul.f32 %v43, %v309
    %v390 = vmul.f32 %v44, %v309
    %v391 = vmul.f32 %v45, %v315
    %v392 = vmul.f32 %v46, %v315
    %v393 = vmul.f32 %v47, %v321
    %v394 = vmul.f32 %v48, %v321
    %v395 = vmul.f32 %v49, %v327
    %v396 = vmul.f32 %v50, %v327
    %v397 = vmul.f32 %v51, %v333
    %v398 = vmul.f32 %v52, %v333
    %v399 = vmul.f32 %v53, %v340
    %v400 = vmul.f32 %v54, %v340
    %v401 = vmul.f32 %v55, %v346
    %v402 = vmul.f32 %v56, %v346
    %v403 = vmul.f32 %v57, %v352
    %v404 = vmul.f32 %v58, %v352
    %v405 = vmul.f32 %v59, %v358
    %v406 = vmul.f32 %v60, %v358
    %v407 = vmul.f32 %v61, %v364
    %v408 = vmul.f32 %v62, %v364
    %v409 = vmul.f32 %v63, %v370
    %v410 = vmul.f32 %v64, %v370
    %v411 = vmul.f32 %v65, %v376
    %v412 = vmul.f32 %v66, %v376
    %v413 = vmul.f32 %v67, %v382
    %v414 = vmul.f32 %v68, %v382
    %415 = vst [vmem:[#allocation5] sm:$0xff] %v383
    %416 = vst [vmem:[#allocation5 + $0x8] sm:$0xff] %v384
    %417 = vst [vmem:[#allocation5 + $0x10] sm:$0xff] %v385
    %418 = vst [vmem:[#allocation5 + $0x18] sm:$0xff] %v386
    %419 = vst [vmem:[#allocation5 + $0x20] sm:$0xff] %v387
    %420 = vst [vmem:[#allocation5 + $0x28] sm:$0xff] %v388
    %421 = vst [vmem:[#allocation5 + $0x30] sm:$0xff] %v389
    %422 = vst [vmem:[#allocation5 + $0x38] sm:$0xff] %v390
    %423 = vst [vmem:[#allocation5 + $0x40] sm:$0xff] %v391
    %424 = vst [vmem:[#allocation5 + $0x48] sm:$0xff] %v392
    %425 = vst [vmem:[#allocation5 + $0x50] sm:$0xff] %v393
    %426 = vst [vmem:[#allocation5 + $0x58] sm:$0xff] %v394
    %427 = vst [vmem:[#allocation5 + $0x60] sm:$0xff] %v395
    %428 = vst [vmem:[#allocation5 + $0x68] sm:$0xff] %v396
    %429 = vst [vmem:[#allocation5 + $0x70] sm:$0xff] %v397
    %430 = vst [vmem:[#allocation5 + $0x78] sm:$0xff] %v398
    %431 = vst [vmem:[#allocation5 + $0x80] sm:$0xff] %v399
    %432 = vst [vmem:[#allocation5 + $0x88] sm:$0xff] %v400
    %433 = vst [vmem:[#allocation5 + $0x90] sm:$0xff] %v401
    %434 = vst [vmem:[#allocation5 + $0x98] sm:$0xff] %v402
    %435 = vst [vmem:[#allocation5 + $0xa0] sm:$0xff] %v403
    %436 = vst [vmem:[#allocation5 + $0xa8] sm:$0xff] %v404
    %437 = vst [vmem:[#allocation5 + $0xb0] sm:$0xff] %v405
    %438 = vst [vmem:[#allocation5 + $0xb8] sm:$0xff] %v406
    %439 = vst [vmem:[#allocation5 + $0xc0] sm:$0xff] %v407
    %440 = vst [vmem:[#allocation5 + $0xc8] sm:$0xff] %v408
    %441 = vst [vmem:[#allocation5 + $0xd0] sm:$0xff] %v409
    %442 = vst [vmem:[#allocation5 + $0xd8] sm:$0xff] %v410
    %443 = vst [vmem:[#allocation5 + $0xe0] sm:$0xff] %v411
    %444 = vst [vmem:[#allocation5 + $0xe8] sm:$0xff] %v412
    %445 = vst [vmem:[#allocation5 + $0xf0] sm:$0xff] %v413
    %446 = vst [vmem:[#allocation5 + $0xf8] sm:$0xff] %v414
    // Predicated region
    $region26: #{tpu_custom_call.1} parent=1 // pred_check
      _
    $region27: #{tpu_custom_call.1} parent=1 // pred_check_branch
      %448 = sbr.rel (0) target = $region29
    $region28: #{tpu_custom_call.1} parent=1 // pred_region
      %450 = vsyncadd [#allocation4], 0
      %s451 = sshll.u32 [#allocation5], 4
      %s452 = int_to_ptr.vmem [resolvable:$true] %s451
      %s453 = sshll.u32 %s5, 4
      %s454 = int_to_ptr.hbm [resolvable:$true] %s453
      %459 = dma.vmem_to_hbm [thread:$0]  %s452, 4096, %s454, [#allocation4], 256, 256, 16
    $region29: #{tpu_custom_call.1} parent=1 // pred_fallthru
      _
    // Predicated region
    $region30: #{tpu_custom_call.1} parent=1 // pred_check
      _
    $region31: #{tpu_custom_call.1} parent=1 // pred_check_branch
      %461 = sbr.rel (0) target = $region33
    $region32: #{tpu_custom_call.1} parent=1 // pred_region
      %463 = dma.done [#allocation4], 4096
    $region33: #{tpu_custom_call.1} parent=1 // pred_fallthru
      _
    %464 = vsyncpa [#allocation3], 1
    %465 = vsyncpa [#allocation4], 1

</llo_original>
